<compile_context>
chip_gen: v7x
topology: tpu7x:2x2x1
jax: 0.10.0
libtpu: 0.0.40
codegen_flags: <defaults>
</compile_context>

<pallas_src>
import jax
import jax.numpy as jnp
from jax.experimental import pallas as pl
from jax.experimental.pallas import tpu as pltpu

KH = KW = 5   # Conv2d kernel size
PAD = 2       # Conv2d padding
POOL = 2      # MaxPool2d kernel/stride
LANE = 128    # TPU lane width

# bf16 operands (MXU-native); accumulation stays f32. Set to jnp.float32 for
# exact PyTorch f32 operand numerics (and tighten the checks accordingly).
MXU_DTYPE = jnp.bfloat16


def conv_bias_pool_kernel(a_ref, b_ref, bias_ref, o_ref):
    """Conv2d (as Toeplitz matmul) + MaxPool2d(2) + bias, lane-dense store.

    a_ref    : (POOL, TM, Kpad)           activations; a_ref[p] holds the
                                          conv rows with h % 2 == p for this
                                          row block, rows ordered (n, h//2)
    b_ref    : (Kpad, POOL*Wo*Cout)       Toeplitz weights, cols (w%2, w//2, o)
    bias_ref : (1, Wo*Cout)               bias tiled over (w//2, o)
    o_ref    : (TM, Wo*Cout)              pooled output rows (lane-dense, 256)
    """
    wo_cout = o_ref.shape[1]
    b = b_ref[...]

    # Even-h and odd-h conv rows: two back-to-back MXU matmuls against the SAME
    # resident B block (same total MXU passes as one fused (2*TM, K) matmul
    # once TM reaches the MXU height, and it keeps the row-block grid
    # expressible with a plain BlockSpec — no in-kernel relayouts).
    acc_even = jnp.dot(a_ref[0], b, preferred_element_type=jnp.float32)
    acc_odd = jnp.dot(a_ref[1], b, preferred_element_type=jnp.float32)

    # MaxPool2d(2): H partners are the two parity slabs, W partners are the two
    # lane halves (w even | w odd). Both splits are vreg-aligned -> pure VPU.
    hmax = jnp.maximum(acc_even, acc_odd)
    pooled = jnp.maximum(hmax[:, :wo_cout], hmax[:, wo_cout:])

    # Bias after pooling: max(a + b, c + b) == max(a, c) + b  (one small add).
    o_ref[...] = (pooled + bias_ref[...]).astype(o_ref.dtype)


def _row_block(nho, target=256):
    """Pooled-output rows per grid step (keep >=256 per step before splitting
    further; on v7x row blocks shard across the two TensorCores)."""
    if nho <= target or nho % 8 != 0:
        return nho
    tm = target - target % 8
    while tm >= 8:
        if nho % tm == 0:
            return tm
        tm -= 8
    return nho


def prepare_nn5_params(w_oihw, bias, H, W):
    """Weight preprocessing, run ONCE per weight (hoisted out of the forward).

    Builds the parity-ordered Toeplitz matrix
        B[(kh, col, c), (w%2, w//2, o)] = w_hwio[kh, col - w, c, o]
    zero-padded along K to a multiple of 128, plus the pooled-order bias row.
    """
    Cout, Cin, kh, kw = w_oihw.shape
    assert (kh, kw) == (KH, KW)
    assert 2 * PAD >= KW - 1, "band construction assumes 2*PAD >= KW-1, stride 1"
    assert H % POOL == 0 and W % POOL == 0
    Wo = W // POOL
    Wp = W + 2 * PAD
    K = KH * Wp * Cin
    Kpad = pl.cdiv(K, LANE) * LANE

    w_hwio = jnp.transpose(w_oihw, (2, 3, 1, 0))                  # OIHW -> HWIO
    bands = jnp.stack(
        [jnp.pad(w_hwio, ((0, 0), (w, Wp - KW - w), (0, 0), (0, 0)))
         for w in range(W)], axis=3)                              # (KH, Wp, Cin, W, Cout)
    bands = bands.reshape(KH, Wp, Cin, Wo, POOL, Cout)            # (.., j, w%2, o)
    b_mat = jnp.transpose(bands, (0, 1, 2, 4, 3, 5)).reshape(
        K, POOL * Wo * Cout)
    b_mat = jnp.pad(b_mat, ((0, Kpad - K), (0, 0))).astype(MXU_DTYPE)

    bias_row = jnp.tile(bias.astype(jnp.float32), Wo).reshape(1, Wo * Cout)
    return b_mat, bias_row


@jax.jit
def nn5_forward(x_nchw, b_mat, bias_row):
    """Forward of nn5: Conv2d(3, 32, 5, padding=2) + MaxPool2d(2), NCHW in/out."""
    N, Cin, H, W = x_nchw.shape
    assert H % POOL == 0 and W % POOL == 0
    Ho, Wo = H // POOL, W // POOL
    Wp = W + 2 * PAD
    K = KH * Wp * Cin
    Kpad = b_mat.shape[0]
    Cout = bias_row.shape[1] // Wo
    assert b_mat.shape == (Kpad, POOL * Wo * Cout) and Kpad >= K

    NHo = N * Ho
    TM = _row_block(NHo)
    n_blocks = NHo // TM

    # ---- activation layout plumbing (fused under jit; tiny at these sizes) ----
    x = jnp.transpose(x_nchw, (0, 2, 3, 1))                       # NCHW -> NHWC
    xp = jnp.pad(x, ((0, 0), (PAD, PAD), (PAD, PAD), (0, 0)))     # (N, Hp, Wp, Cin)
    # A[p, (n, h//2), (kh, col, c)] = xp[n, h + kh, col, c]  with p = h % 2.
    slabs = jnp.stack([xp[:, kh:kh + H, :, :] for kh in range(KH)], axis=2)
    slabs = slabs.reshape(N, Ho, POOL, KH, Wp, Cin)               # (n, i, h%2, kh, col, c)
    a3 = jnp.transpose(slabs, (2, 0, 1, 3, 4, 5)).reshape(POOL, NHo, K)
    a3 = jnp.pad(a3, ((0, 0), (0, 0), (0, Kpad - K))).astype(MXU_DTYPE)
    # TODO(synk): at large H/W/N, stream xp per-kh inside the kernel instead of
    # materializing the KH-fold duplicated a3, and column-tile b_mat once the
    # bf16 Toeplitz slab approaches v7x's scoped VMEM.

    cost = pl.CostEstimate(
        flops=2 * (POOL * NHo) * Kpad * (POOL * Wo * Cout),
        transcendentals=0,
        bytes_accessed=(a3.size * a3.dtype.itemsize
                        + n_blocks * (b_mat.size * b_mat.dtype.itemsize
                                      + bias_row.size * 4)
                        + NHo * Wo * Cout * 4),
    )

    out2d = pl.pallas_call(
        conv_bias_pool_kernel,
        out_shape=jax.ShapeDtypeStruct((NHo, Wo * Cout), jnp.float32),
        grid=(n_blocks,),
        in_specs=[
            pl.BlockSpec((POOL, TM, Kpad), lambda i: (0, i, 0)),
            pl.BlockSpec((Kpad, POOL * Wo * Cout), lambda i: (0, 0)),
            pl.BlockSpec((1, Wo * Cout), lambda i: (0, 0)),
        ],
        out_specs=pl.BlockSpec((TM, Wo * Cout), lambda i: (i, 0)),
        compiler_params=pltpu.CompilerParams(
            # Row blocks are independent: shards across v7x's two TensorCores
            # and lets BlockSpec double-buffer when the grid has >1 step.
            dimension_semantics=("parallel",)),
        cost_estimate=cost,
    )(a3, b_mat, bias_row)

    out = out2d.reshape(N, Ho, Wo, Cout)                          # (n, i, j, o)
    return jnp.transpose(out, (0, 3, 1, 2))                       # NHWC -> NCHW


def _reference(x_nchw, w_oihw, bias, precision=None):
    """Pure-JAX reference (lax conv + reduce_window)."""
    conv = jax.lax.conv_general_dilated(
        x_nchw, w_oihw, window_strides=(1, 1),
        padding=((PAD, PAD), (PAD, PAD)),
        dimension_numbers=("NCHW", "OIHW", "NCHW"),
        precision=precision)
    conv = conv + bias.reshape(1, -1, 1, 1)
    return jax.lax.reduce_window(
        conv, -jnp.inf, jax.lax.max,
        window_dimensions=(1, 1, POOL, POOL),
        window_strides=(1, 1, POOL, POOL),
        padding="VALID")


if __name__ == "__main__":
    key = jax.random.PRNGKey(0)
    k_x, k_w, k_b = jax.random.split(key, 3)

    # Small shapes consistent with the module: Conv2d expects Cin = 3.
    N, Cin, H, W = 2, 3, 16, 16
    Cout = 32

    x = jax.random.normal(k_x, (N, Cin, H, W), dtype=jnp.float32)
    # PyTorch-shaped synthetic parameters: OIHW weight, (Cout,) bias.
    w = jax.random.normal(k_w, (Cout, Cin, KH, KW), dtype=jnp.float32) * 0.1
    b = jax.random.normal(k_b, (Cout,), dtype=jnp.float32) * 0.1

    # Weight preprocessing runs once per weight, not per forward call.
    b_mat, bias_row = prepare_nn5_params(w, b, H, W)

    out = jax.block_until_ready(nn5_forward(x, b_mat, bias_row))
    assert out.shape == (N, Cout, H // POOL, W // POOL), out.shape

    # Tight check: reference fed the same bf16-rounded operands (accumulation
    # and pooling are f32 in both), so only summation-order noise remains.
    xq = x.astype(MXU_DTYPE).astype(jnp.float32)
    wq = w.astype(MXU_DTYPE).astype(jnp.float32)
    ref_q = _reference(xq, wq, b, precision=jax.lax.Precision.HIGHEST)
    assert jnp.allclose(out, ref_q, atol=1e-3, rtol=1e-3), \
        float(jnp.max(jnp.abs(out - ref_q)))

    # Sanity bound against the exact f32 module semantics (bf16 operand error).
    ref_f32 = _reference(x, w, b, precision=jax.lax.Precision.HIGHEST)
    assert jnp.allclose(out, ref_f32, atol=5e-2, rtol=5e-2), \
        float(jnp.max(jnp.abs(out - ref_f32)))

    print("KERNEL_OK")
</pallas_src>

<mosaic_0001>
module attributes {stable_mosaic.version = 11 : i64} {
  func.func @conv_bias_pool_kernel(%arg0: i32, %arg1: memref<2x16x384xbf16, #tpu.memory_space<vmem>>, %arg2: memref<384x512xbf16, #tpu.memory_space<vmem>>, %arg3: memref<1x256xf32, #tpu.memory_space<vmem>>, %arg4: memref<16x256xf32, #tpu.memory_space<vmem>>) attributes {dimension_semantics = [#tpu.dimension_semantics<parallel>], iteration_bounds = array<i64: 1>, scalar_prefetch = 0 : i64, scratch_operands = 0 : i64, tpu.core_type = #tpu.core_type<tc>, window_params = [{transform_indices = @transform_0, window_bounds = array<i64: 2, 16, 384>}, {pipeline_mode = #tpu.pipeline_mode<synchronous>, transform_indices = @transform_1, window_bounds = array<i64: 384, 512>}, {pipeline_mode = #tpu.pipeline_mode<synchronous>, transform_indices = @transform_2, window_bounds = array<i64: 1, 256>}, {transform_indices = @transform_3, window_bounds = array<i64: 16, 256>}]} {
    %c0 = arith.constant 0 : index
    %c0_0 = arith.constant 0 : index
    %0 = vector.load %arg2[%c0, %c0_0] : memref<384x512xbf16, #tpu.memory_space<vmem>>, vector<384x512xbf16>
    %c0_1 = arith.constant 0 : index
    %c0_2 = arith.constant 0 : index
    %c0_3 = arith.constant 0 : index
    %1 = vector.load %arg1[%c0_1, %c0_2, %c0_3] : memref<2x16x384xbf16, #tpu.memory_space<vmem>>, vector<1x16x384xbf16>
    %2 = vector.shape_cast %1 : vector<1x16x384xbf16> to vector<16x384xbf16>
    %cst = arith.constant dense<0.000000e+00> : vector<16x512xf32>
    %3 = tpu.matmul %2, %0, %cst {dimension_numbers = #tpu.dot_dimension_numbers<[1], [0], [0], [1], [0, 0, 1, 1], [], []>} : vector<16x384xbf16>, vector<384x512xbf16>, vector<16x512xf32> -> vector<16x512xf32>
    %c1 = arith.constant 1 : index
    %c0_4 = arith.constant 0 : index
    %c0_5 = arith.constant 0 : index
    %4 = vector.load %arg1[%c1, %c0_4, %c0_5] : memref<2x16x384xbf16, #tpu.memory_space<vmem>>, vector<1x16x384xbf16>
    %5 = vector.shape_cast %4 : vector<1x16x384xbf16> to vector<16x384xbf16>
    %cst_6 = arith.constant dense<0.000000e+00> : vector<16x512xf32>
    %6 = tpu.matmul %5, %0, %cst_6 {dimension_numbers = #tpu.dot_dimension_numbers<[1], [0], [0], [1], [0, 0, 1, 1], [], []>} : vector<16x384xbf16>, vector<384x512xbf16>, vector<16x512xf32> -> vector<16x512xf32>
    %7 = arith.maximumf %3, %6 : vector<16x512xf32>
    %8 = vector.extract_strided_slice %7 {offsets = [0, 0], sizes = [16, 256], strides = [1, 1]} : vector<16x512xf32> to vector<16x256xf32>
    %9 = vector.extract_strided_slice %7 {offsets = [0, 256], sizes = [16, 256], strides = [1, 1]} : vector<16x512xf32> to vector<16x256xf32>
    %10 = arith.maximumf %8, %9 : vector<16x256xf32>
    %c0_7 = arith.constant 0 : index
    %c0_8 = arith.constant 0 : index
    %11 = vector.load %arg3[%c0_7, %c0_8] : memref<1x256xf32, #tpu.memory_space<vmem>>, vector<1x256xf32>
    %12 = vector.broadcast %11 : vector<1x256xf32> to vector<16x256xf32>
    %13 = arith.addf %10, %12 : vector<16x256xf32>
    %c0_9 = arith.constant 0 : index
    %c0_10 = arith.constant 0 : index
    %14 = vector.load %arg4[%c0_9, %c0_10] : memref<16x256xf32, #tpu.memory_space<vmem>>, vector<16x256xf32>
    tpu.vector_store %arg4[%c0_9, %c0_10], %13 {strides = array<i32>} : memref<16x256xf32, #tpu.memory_space<vmem>>, vector<16x256xf32>,
    return
  }
  func.func @transform_0(%arg0: i32) -> (i32, i32, i32) {
    %c0_i32 = arith.constant 0 : i32
    %c0_i32_0 = arith.constant 0 : i32
    %c0_i32_1 = arith.constant 0 : i32
    return %c0_i32, %arg0, %c0_i32_0 : i32, i32, i32
  }
  func.func @transform_1(%arg0: i32) -> (i32, i32) {
    %c0_i32 = arith.constant 0 : i32
    %c0_i32_0 = arith.constant 0 : i32
    %c0_i32_1 = arith.constant 0 : i32
    return %c0_i32, %c0_i32_0 : i32, i32
  }
  func.func @transform_2(%arg0: i32) -> (i32, i32) {
    %c0_i32 = arith.constant 0 : i32
    %c0_i32_0 = arith.constant 0 : i32
    %c0_i32_1 = arith.constant 0 : i32
    return %c0_i32, %c0_i32_0 : i32, i32
  }
  func.func @transform_3(%arg0: i32) -> (i32, i32) {
    %c0_i32 = arith.constant 0 : i32
    %c0_i32_0 = arith.constant 0 : i32
    return %arg0, %c0_i32 : i32, i32
  }
}

</mosaic_0001>

<llo_original>
// kernel: nn5_forward.1
$region0: #{nn5_forward.1}
  #allocation0 [shape = 'u32[]', space=smem, size = 0x4, offset = 0x4, fixed_abs, tag = 'smem constant byte address 0x4 - core index']
  #allocation1 [shape = 'u32[144,128]{1,0:T(1,128)}', space=vmem, size = 0x12000, scoped, tag = 'internal scratch']
  %s0 = inlined_call_operand.vmem [shape: bf16[2,16,384], index: 0, kind: input, shape index: {}]
  %s1 = inlined_call_operand.vmem [shape: bf16[384,512], index: 1, kind: input, shape index: {}]
  %s2 = inlined_call_operand.vmem [shape: f32[1,256], index: 2, kind: input, shape index: {}]
  %s3 = inlined_call_operand.vmem [shape: f32[16,256], index: 3, kind: output, shape index: {}]
  %s4 = sld [smem:[#allocation0]]
  $region22: #{nn5_forward.1} parent=0
    _
  %s6 = ssub.s32 1, %s4
  %s7 = scalar_select 0, %s6, %s4
  // Predicated region
  $region2: #{nn5_forward.1} parent=0 // pred_check
    _
  $region3: #{nn5_forward.1} parent=0 // pred_check_branch
    %9 = sbr.rel (0) target = $region5
  $region4: #{nn5_forward.1} parent=0 // pred_region
    _
  $region5: #{nn5_forward.1} parent=0 // pred_fallthru
    _
  // Predicated region
  $region6: #{nn5_forward.1} parent=0 // pred_check
    _
  $region7: #{nn5_forward.1} parent=0 // pred_check_branch
    %11 = sbr.rel (0) target = $region9
  $region8: #{nn5_forward.1} parent=0 // pred_region
    _
  $region9: #{nn5_forward.1} parent=0 // pred_fallthru
    _
  // Predicated region
  $region10: #{nn5_forward.1} parent=0 // pred_check
    _
  $region11: #{nn5_forward.1} parent=0 // pred_check_branch
    %13 = sbr.rel (0) target = $region13
  $region12: #{nn5_forward.1} parent=0 // pred_region
    _
  $region13: #{nn5_forward.1} parent=0 // pred_fallthru
    _
  %v15 = vld [vmem:[%s1] sm:$0xff]
  %v16 = vld [vmem:[%s1 + $0x8] sm:$0xff]
  %v17 = vld [vmem:[%s1 + $0x10] sm:$0xff]
  %v18 = vld [vmem:[%s1 + $0x18] sm:$0xff]
  %v19 = vld [vmem:[%s1 + $0x20] sm:$0xff]
  %v20 = vld [vmem:[%s1 + $0x28] sm:$0xff]
  %v21 = vld [vmem:[%s1 + $0x30] sm:$0xff]
  %v22 = vld [vmem:[%s1 + $0x38] sm:$0xff]
  %v23 = vld [vmem:[%s1 + $0x40] sm:$0xff]
  %v24 = vld [vmem:[%s1 + $0x48] sm:$0xff]
  %v25 = vld [vmem:[%s1 + $0x50] sm:$0xff]
  %v26 = vld [vmem:[%s1 + $0x58] sm:$0xff]
  %v27 = vld [vmem:[%s1 + $0x60] sm:$0xff]
  %v28 = vld [vmem:[%s1 + $0x68] sm:$0xff]
  %v29 = vld [vmem:[%s1 + $0x70] sm:$0xff]
  %v30 = vld [vmem:[%s1 + $0x78] sm:$0xff]
  %v31 = vld [vmem:[%s1 + $0x80] sm:$0xff]
  %v32 = vld [vmem:[%s1 + $0x88] sm:$0xff]
  %v33 = vld [vmem:[%s1 + $0x90] sm:$0xff]
  %v34 = vld [vmem:[%s1 + $0x98] sm:$0xff]
  %v35 = vld [vmem:[%s1 + $0xa0] sm:$0xff]
  %v36 = vld [vmem:[%s1 + $0xa8] sm:$0xff]
  %v37 = vld [vmem:[%s1 + $0xb0] sm:$0xff]
  %v38 = vld [vmem:[%s1 + $0xb8] sm:$0xff]
  %v39 = vld [vmem:[%s1 + $0xc0] sm:$0xff]
  %v40 = vld [vmem:[%s1 + $0xc8] sm:$0xff]
  %v41 = vld [vmem:[%s1 + $0xd0] sm:$0xff]
  %v42 = vld [vmem:[%s1 + $0xd8] sm:$0xff]
  %v43 = vld [vmem:[%s1 + $0xe0] sm:$0xff]
  %v44 = vld [vmem:[%s1 + $0xe8] sm:$0xff]
  %v45 = vld [vmem:[%s1 + $0xf0] sm:$0xff]
  %v46 = vld [vmem:[%s1 + $0xf8] sm:$0xff]
  %v47 = vld [vmem:[%s1 + $0x100] sm:$0xff]
  %v48 = vld [vmem:[%s1 + $0x108] sm:$0xff]
  %v49 = vld [vmem:[%s1 + $0x110] sm:$0xff]
  %v50 = vld [vmem:[%s1 + $0x118] sm:$0xff]
  %v51 = vld [vmem:[%s1 + $0x120] sm:$0xff]
  %v52 = vld [vmem:[%s1 + $0x128] sm:$0xff]
  %v53 = vld [vmem:[%s1 + $0x130] sm:$0xff]
  %v54 = vld [vmem:[%s1 + $0x138] sm:$0xff]
  %v55 = vld [vmem:[%s1 + $0x140] sm:$0xff]
  %v56 = vld [vmem:[%s1 + $0x148] sm:$0xff]
  %v57 = vld [vmem:[%s1 + $0x150] sm:$0xff]
  %v58 = vld [vmem:[%s1 + $0x158] sm:$0xff]
  %v59 = vld [vmem:[%s1 + $0x160] sm:$0xff]
  %v60 = vld [vmem:[%s1 + $0x168] sm:$0xff]
  %v61 = vld [vmem:[%s1 + $0x170] sm:$0xff]
  %v62 = vld [vmem:[%s1 + $0x178] sm:$0xff]
  %v63 = vld [vmem:[%s1 + $0x180] sm:$0xff]
  %v64 = vld [vmem:[%s1 + $0x188] sm:$0xff]
  %v65 = vld [vmem:[%s1 + $0x190] sm:$0xff]
  %v66 = vld [vmem:[%s1 + $0x198] sm:$0xff]
  %v67 = vld [vmem:[%s1 + $0x1a0] sm:$0xff]
  %v68 = vld [vmem:[%s1 + $0x1a8] sm:$0xff]
  %v69 = vld [vmem:[%s1 + $0x1b0] sm:$0xff]
  %v70 = vld [vmem:[%s1 + $0x1b8] sm:$0xff]
  %v71 = vld [vmem:[%s1 + $0x1c0] sm:$0xff]
  %v72 = vld [vmem:[%s1 + $0x1c8] sm:$0xff]
  %v73 = vld [vmem:[%s1 + $0x1d0] sm:$0xff]
  %v74 = vld [vmem:[%s1 + $0x1d8] sm:$0xff]
  %v75 = vld [vmem:[%s1 + $0x1e0] sm:$0xff]
  %v76 = vld [vmem:[%s1 + $0x1e8] sm:$0xff]
  %v77 = vld [vmem:[%s1 + $0x1f0] sm:$0xff]
  %v78 = vld [vmem:[%s1 + $0x1f8] sm:$0xff]
  %v79 = vld [vmem:[%s1 + $0x200] sm:$0xff]
  %v80 = vld [vmem:[%s1 + $0x208] sm:$0xff]
  %v81 = vld [vmem:[%s1 + $0x210] sm:$0xff]
  %v82 = vld [vmem:[%s1 + $0x218] sm:$0xff]
  %v83 = vld [vmem:[%s1 + $0x220] sm:$0xff]
  %v84 = vld [vmem:[%s1 + $0x228] sm:$0xff]
  %v85 = vld [vmem:[%s1 + $0x230] sm:$0xff]
  %v86 = vld [vmem:[%s1 + $0x238] sm:$0xff]
  %v87 = vld [vmem:[%s1 + $0x240] sm:$0xff]
  %v88 = vld [vmem:[%s1 + $0x248] sm:$0xff]
  %v89 = vld [vmem:[%s1 + $0x250] sm:$0xff]
  %v90 = vld [vmem:[%s1 + $0x258] sm:$0xff]
  %v91 = vld [vmem:[%s1 + $0x260] sm:$0xff]
  %v92 = vld [vmem:[%s1 + $0x268] sm:$0xff]
  %v93 = vld [vmem:[%s1 + $0x270] sm:$0xff]
  %v94 = vld [vmem:[%s1 + $0x278] sm:$0xff]
  %v95 = vld [vmem:[%s1 + $0x280] sm:$0xff]
  %v96 = vld [vmem:[%s1 + $0x288] sm:$0xff]
  %v97 = vld [vmem:[%s1 + $0x290] sm:$0xff]
  %v98 = vld [vmem:[%s1 + $0x298] sm:$0xff]
  %v99 = vld [vmem:[%s1 + $0x2a0] sm:$0xff]
  %v100 = vld [vmem:[%s1 + $0x2a8] sm:$0xff]
  %v101 = vld [vmem:[%s1 + $0x2b0] sm:$0xff]
  %v102 = vld [vmem:[%s1 + $0x2b8] sm:$0xff]
  %v103 = vld [vmem:[%s1 + $0x2c0] sm:$0xff]
  %v104 = vld [vmem:[%s1 + $0x2c8] sm:$0xff]
  %v105 = vld [vmem:[%s1 + $0x2d0] sm:$0xff]
  %v106 = vld [vmem:[%s1 + $0x2d8] sm:$0xff]
  %v107 = vld [vmem:[%s1 + $0x2e0] sm:$0xff]
  %v108 = vld [vmem:[%s1 + $0x2e8] sm:$0xff]
  %v109 = vld [vmem:[%s1 + $0x2f0] sm:$0xff]
  %v110 = vld [vmem:[%s1 + $0x2f8] sm:$0xff]
  %v111 = vld [vmem:[%s0] sm:$0xff]
  %v112 = vld [vmem:[%s0 + $0x8] sm:$0xf]
  %v113 = vld [vmem:[%s0 + $0xc] sm:$0xff]
  %v114 = vld [vmem:[%s0 + $0x14] sm:$0xf]
  %v119 = vunpack.c.l.b16 %v111
  %v120 = vunpack.c.h.b16 %v111
  %v121 = vunpack.c.l.b16 %v112
  %v122 = vunpack.c.l.b16 %v113
  %v123 = vunpack.c.h.b16 %v113
  %v124 = vunpack.c.l.b16 %v114
  %v125 = vpack.c.b16 %v122, %v119
  %v126 = vpack.c.b16 %v123, %v120
  %v127 = vpack.c.b16 %v124, %v121
  %v227 = vunpack.c.l.b16 %v15
  %v228 = vunpack.c.h.b16 %v15
  %v229 = vunpack.c.l.b16 %v16
  %v230 = vunpack.c.h.b16 %v16
  %v231 = vunpack.c.l.b16 %v17
  %v232 = vunpack.c.h.b16 %v17
  %v233 = vunpack.c.l.b16 %v18
  %v234 = vunpack.c.h.b16 %v18
  %v235 = vunpack.c.l.b16 %v19
  %v236 = vunpack.c.h.b16 %v19
  %v237 = vunpack.c.l.b16 %v20
  %v238 = vunpack.c.h.b16 %v20
  %v239 = vunpack.c.l.b16 %v21
  %v240 = vunpack.c.h.b16 %v21
  %v241 = vunpack.c.l.b16 %v22
  %v242 = vunpack.c.h.b16 %v22
  %v243 = vunpack.c.l.b16 %v23
  %v244 = vunpack.c.h.b16 %v23
  %v245 = vunpack.c.l.b16 %v24
  %v246 = vunpack.c.h.b16 %v24
  %v247 = vunpack.c.l.b16 %v25
  %v248 = vunpack.c.h.b16 %v25
  %v249 = vunpack.c.l.b16 %v26
  %v250 = vunpack.c.h.b16 %v26
  %v251 = vunpack.c.l.b16 %v27
  %v252 = vunpack.c.h.b16 %v27
  %v253 = vunpack.c.l.b16 %v28
  %v254 = vunpack.c.h.b16 %v28
  %v255 = vunpack.c.l.b16 %v29
  %v256 = vunpack.c.h.b16 %v29
  %v257 = vunpack.c.l.b16 %v30
  %v258 = vunpack.c.h.b16 %v30
  %v259 = vunpack.c.l.b16 %v31
  %v260 = vunpack.c.h.b16 %v31
  %v261 = vunpack.c.l.b16 %v32
  %v262 = vunpack.c.h.b16 %v32
  %v263 = vunpack.c.l.b16 %v33
  %v264 = vunpack.c.h.b16 %v33
  %v265 = vunpack.c.l.b16 %v34
  %v266 = vunpack.c.h.b16 %v34
  %v267 = vunpack.c.l.b16 %v35
  %v268 = vunpack.c.h.b16 %v35
  %v269 = vunpack.c.l.b16 %v36
  %v270 = vunpack.c.h.b16 %v36
  %v271 = vunpack.c.l.b16 %v37
  %v272 = vunpack.c.h.b16 %v37
  %v273 = vunpack.c.l.b16 %v38
  %v274 = vunpack.c.h.b16 %v38
  %v275 = vunpack.c.l.b16 %v39
  %v276 = vunpack.c.h.b16 %v39
  %v277 = vunpack.c.l.b16 %v40
  %v278 = vunpack.c.h.b16 %v40
  %v279 = vunpack.c.l.b16 %v41
  %v280 = vunpack.c.h.b16 %v41
  %v281 = vunpack.c.l.b16 %v42
  %v282 = vunpack.c.h.b16 %v42
  %v283 = vunpack.c.l.b16 %v43
  %v284 = vunpack.c.h.b16 %v43
  %v285 = vunpack.c.l.b16 %v44
  %v286 = vunpack.c.h.b16 %v44
  %v287 = vunpack.c.l.b16 %v45
  %v288 = vunpack.c.h.b16 %v45
  %v289 = vunpack.c.l.b16 %v46
  %v290 = vunpack.c.h.b16 %v46
  %v291 = vunpack.c.l.b16 %v47
  %v292 = vunpack.c.h.b16 %v47
  %v293 = vunpack.c.l.b16 %v48
  %v294 = vunpack.c.h.b16 %v48
  %v295 = vunpack.c.l.b16 %v49
  %v296 = vunpack.c.h.b16 %v49
  %v297 = vunpack.c.l.b16 %v50
  %v298 = vunpack.c.h.b16 %v50
  %v299 = vunpack.c.l.b16 %v51
  %v300 = vunpack.c.h.b16 %v51
  %v301 = vunpack.c.l.b16 %v52
  %v302 = vunpack.c.h.b16 %v52
  %v303 = vunpack.c.l.b16 %v53
  %v304 = vunpack.c.h.b16 %v53
  %v305 = vunpack.c.l.b16 %v54
  %v306 = vunpack.c.h.b16 %v54
  %v307 = vunpack.c.l.b16 %v55
  %v308 = vunpack.c.h.b16 %v55
  %v309 = vunpack.c.l.b16 %v56
  %v310 = vunpack.c.h.b16 %v56
  %v311 = vunpack.c.l.b16 %v57
  %v312 = vunpack.c.h.b16 %v57
  %v313 = vunpack.c.l.b16 %v58
  %v314 = vunpack.c.h.b16 %v58
  %v315 = vunpack.c.l.b16 %v59
  %v316 = vunpack.c.h.b16 %v59
  %v317 = vunpack.c.l.b16 %v60
  %v318 = vunpack.c.h.b16 %v60
  %v319 = vunpack.c.l.b16 %v61
  %v320 = vunpack.c.h.b16 %v61
  %v321 = vunpack.c.l.b16 %v62
  %v322 = vunpack.c.h.b16 %v62
  %v323 = vunpack.c.l.b16 %v63
  %v324 = vunpack.c.h.b16 %v63
  %v325 = vunpack.c.l.b16 %v64
  %v326 = vunpack.c.h.b16 %v64
  %v327 = vunpack.c.l.b16 %v65
  %v328 = vunpack.c.h.b16 %v65
  %v329 = vunpack.c.l.b16 %v66
  %v330 = vunpack.c.h.b16 %v66
  %v331 = vunpack.c.l.b16 %v67
  %v332 = vunpack.c.h.b16 %v67
  %v333 = vunpack.c.l.b16 %v68
  %v334 = vunpack.c.h.b16 %v68
  %v335 = vunpack.c.l.b16 %v69
  %v336 = vunpack.c.h.b16 %v69
  %v337 = vunpack.c.l.b16 %v70
  %v338 = vunpack.c.h.b16 %v70
  %v339 = vunpack.c.l.b16 %v71
  %v340 = vunpack.c.h.b16 %v71
  %v341 = vunpack.c.l.b16 %v72
  %v342 = vunpack.c.h.b16 %v72
  %v343 = vunpack.c.l.b16 %v73
  %v344 = vunpack.c.h.b16 %v73
  %v345 = vunpack.c.l.b16 %v74
  %v346 = vunpack.c.h.b16 %v74
  %v347 = vunpack.c.l.b16 %v75
  %v348 = vunpack.c.h.b16 %v75
  %v349 = vunpack.c.l.b16 %v76
  %v350 = vunpack.c.h.b16 %v76
  %v351 = vunpack.c.l.b16 %v77
  %v352 = vunpack.c.h.b16 %v77
  %v353 = vunpack.c.l.b16 %v78
  %v354 = vunpack.c.h.b16 %v78
  %v355 = vunpack.c.l.b16 %v79
  %v356 = vunpack.c.h.b16 %v79
  %v357 = vunpack.c.l.b16 %v80
  %v358 = vunpack.c.h.b16 %v80
  %v359 = vunpack.c.l.b16 %v81
  %v360 = vunpack.c.h.b16 %v81
  %v361 = vunpack.c.l.b16 %v82
  %v362 = vunpack.c.h.b16 %v82
  %v363 = vunpack.c.l.b16 %v83
  %v364 = vunpack.c.h.b16 %v83
  %v365 = vunpack.c.l.b16 %v84
  %v366 = vunpack.c.h.b16 %v84
  %v367 = vunpack.c.l.b16 %v85
  %v368 = vunpack.c.h.b16 %v85
  %v369 = vunpack.c.l.b16 %v86
  %v370 = vunpack.c.h.b16 %v86
  %v371 = vunpack.c.l.b16 %v87
  %v372 = vunpack.c.h.b16 %v87
  %v373 = vunpack.c.l.b16 %v88
  %v374 = vunpack.c.h.b16 %v88
  %v375 = vunpack.c.l.b16 %v89
  %v376 = vunpack.c.h.b16 %v89
  %v377 = vunpack.c.l.b16 %v90
  %v378 = vunpack.c.h.b16 %v90
  %v379 = vunpack.c.l.b16 %v91
  %v380 = vunpack.c.h.b16 %v91
  %v381 = vunpack.c.l.b16 %v92
  %v382 = vunpack.c.h.b16 %v92
  %v383 = vunpack.c.l.b16 %v93
  %v384 = vunpack.c.h.b16 %v93
  %v385 = vunpack.c.l.b16 %v94
  %v386 = vunpack.c.h.b16 %v94
  %v387 = vunpack.c.l.b16 %v95
  %v388 = vunpack.c.h.b16 %v95
  %v389 = vunpack.c.l.b16 %v96
  %v390 = vunpack.c.h.b16 %v96
  %v391 = vunpack.c.l.b16 %v97
  %v392 = vunpack.c.h.b16 %v97
  %v393 = vunpack.c.l.b16 %v98
  %v394 = vunpack.c.h.b16 %v98
  %v395 = vunpack.c.l.b16 %v99
  %v396 = vunpack.c.h.b16 %v99
  %v397 = vunpack.c.l.b16 %v100
  %v398 = vunpack.c.h.b16 %v100
  %v399 = vunpack.c.l.b16 %v101
  %v400 = vunpack.c.h.b16 %v101
  %v401 = vunpack.c.l.b16 %v102
  %v402 = vunpack.c.h.b16 %v102
  %v403 = vunpack.c.l.b16 %v103
  %v404 = vunpack.c.h.b16 %v103
  %v405 = vunpack.c.l.b16 %v104
  %v406 = vunpack.c.h.b16 %v104
  %v407 = vunpack.c.l.b16 %v105
  %v408 = vunpack.c.h.b16 %v105
  %v409 = vunpack.c.l.b16 %v106
  %v410 = vunpack.c.h.b16 %v106
  %v411 = vunpack.c.l.b16 %v107
  %v412 = vunpack.c.h.b16 %v107
  %v413 = vunpack.c.l.b16 %v108
  %v414 = vunpack.c.h.b16 %v108
  %v415 = vunpack.c.l.b16 %v109
  %v416 = vunpack.c.h.b16 %v109
  %v417 = vunpack.c.l.b16 %v110
  %v418 = vunpack.c.h.b16 %v110
  %v419 = vpack.c.b16 %v231, %v227
  %v420 = vpack.c.b16 %v232, %v228
  %v421 = vpack.c.b16 %v233, %v229
  %v422 = vpack.c.b16 %v234, %v230
  %v423 = vpack.c.b16 %v239, %v235
  %v424 = vpack.c.b16 %v240, %v236
  %v425 = vpack.c.b16 %v241, %v237
  %v426 = vpack.c.b16 %v242, %v238
  %v427 = vpack.c.b16 %v247, %v243
  %v428 = vpack.c.b16 %v248, %v244
  %v429 = vpack.c.b16 %v249, %v245
  %v430 = vpack.c.b16 %v250, %v246
  %v431 = vpack.c.b16 %v255, %v251
  %v432 = vpack.c.b16 %v256, %v252
  %v433 = vpack.c.b16 %v257, %v253
  %v434 = vpack.c.b16 %v258, %v254
  %v435 = vpack.c.b16 %v263, %v259
  %v436 = vpack.c.b16 %v264, %v260
  %v437 = vpack.c.b16 %v265, %v261
  %v438 = vpack.c.b16 %v266, %v262
  %v439 = vpack.c.b16 %v271, %v267
  %v440 = vpack.c.b16 %v272, %v268
  %v441 = vpack.c.b16 %v273, %v269
  %v442 = vpack.c.b16 %v274, %v270
  %v443 = vpack.c.b16 %v279, %v275
  %v444 = vpack.c.b16 %v280, %v276
  %v445 = vpack.c.b16 %v281, %v277
  %v446 = vpack.c.b16 %v282, %v278
  %v447 = vpack.c.b16 %v287, %v283
  %v448 = vpack.c.b16 %v288, %v284
  %v449 = vpack.c.b16 %v289, %v285
  %v450 = vpack.c.b16 %v290, %v286
  %v451 = vpack.c.b16 %v295, %v291
  %v452 = vpack.c.b16 %v296, %v292
  %v453 = vpack.c.b16 %v297, %v293
  %v454 = vpack.c.b16 %v298, %v294
  %v455 = vpack.c.b16 %v303, %v299
  %v456 = vpack.c.b16 %v304, %v300
  %v457 = vpack.c.b16 %v305, %v301
  %v458 = vpack.c.b16 %v306, %v302
  %v459 = vpack.c.b16 %v311, %v307
  %v460 = vpack.c.b16 %v312, %v308
  %v461 = vpack.c.b16 %v313, %v309
  %v462 = vpack.c.b16 %v314, %v310
  %v463 = vpack.c.b16 %v319, %v315
  %v464 = vpack.c.b16 %v320, %v316
  %v465 = vpack.c.b16 %v321, %v317
  %v466 = vpack.c.b16 %v322, %v318
  %v467 = vpack.c.b16 %v327, %v323
  %v468 = vpack.c.b16 %v328, %v324
  %v469 = vpack.c.b16 %v329, %v325
  %v470 = vpack.c.b16 %v330, %v326
  %v471 = vpack.c.b16 %v335, %v331
  %v472 = vpack.c.b16 %v336, %v332
  %v473 = vpack.c.b16 %v337, %v333
  %v474 = vpack.c.b16 %v338, %v334
  %v475 = vpack.c.b16 %v343, %v339
  %v476 = vpack.c.b16 %v344, %v340
  %v477 = vpack.c.b16 %v345, %v341
  %v478 = vpack.c.b16 %v346, %v342
  %v479 = vpack.c.b16 %v351, %v347
  %v480 = vpack.c.b16 %v352, %v348
  %v481 = vpack.c.b16 %v353, %v349
  %v482 = vpack.c.b16 %v354, %v350
  %v483 = vpack.c.b16 %v359, %v355
  %v484 = vpack.c.b16 %v360, %v356
  %v485 = vpack.c.b16 %v361, %v357
  %v486 = vpack.c.b16 %v362, %v358
  %v487 = vpack.c.b16 %v367, %v363
  %v488 = vpack.c.b16 %v368, %v364
  %v489 = vpack.c.b16 %v369, %v365
  %v490 = vpack.c.b16 %v370, %v366
  %v491 = vpack.c.b16 %v375, %v371
  %v492 = vpack.c.b16 %v376, %v372
  %v493 = vpack.c.b16 %v377, %v373
  %v494 = vpack.c.b16 %v378, %v374
  %v495 = vpack.c.b16 %v383, %v379
  %v496 = vpack.c.b16 %v384, %v380
  %v497 = vpack.c.b16 %v385, %v381
  %v498 = vpack.c.b16 %v386, %v382
  %v499 = vpack.c.b16 %v391, %v387
  %v500 = vpack.c.b16 %v392, %v388
  %v501 = vpack.c.b16 %v393, %v389
  %v502 = vpack.c.b16 %v394, %v390
  %v503 = vpack.c.b16 %v399, %v395
  %v504 = vpack.c.b16 %v400, %v396
  %v505 = vpack.c.b16 %v401, %v397
  %v506 = vpack.c.b16 %v402, %v398
  %v507 = vpack.c.b16 %v407, %v403
  %v508 = vpack.c.b16 %v408, %v404
  %v509 = vpack.c.b16 %v409, %v405
  %v510 = vpack.c.b16 %v410, %v406
  %v511 = vpack.c.b16 %v415, %v411
  %v512 = vpack.c.b16 %v416, %v412
  %v513 = vpack.c.b16 %v417, %v413
  %v514 = vpack.c.b16 %v418, %v414
  %611 = vmatprep.subr.bf16.mxu0 %v420
  %612 = vmatpush1.bf16.msra.mxu0 %v419
  %613 = vmatprep.subr.bf16.mxu0 %v424
  %614 = vmatpush1.bf16.msra.mxu0 %v423
  %615 = vmatprep.subr.bf16.mxu0 %v428
  %616 = vmatpush1.bf16.msra.mxu0 %v427
  %617 = vmatprep.subr.bf16.mxu0 %v432
  %618 = vmatpush1.bf16.msra.mxu0 %v431
  %619 = vmatprep.subr.bf16.mxu0 %v436
  %620 = vmatpush1.bf16.msra.mxu0 %v435
  %621 = vmatprep.subr.bf16.mxu0 %v440
  %622 = vmatpush1.bf16.msra.mxu0 %v439
  %623 = vmatprep.subr.bf16.mxu0 %v444
  %624 = vmatpush1.bf16.msra.mxu0 %v443
  %625 = vmatprep.subr.bf16.mxu0 %v448
  %626 = vmatpush1.bf16.msra.mxu0 %v447
  %627 = vmatprep.subr.bf16.mxu0 %v452
  %628 = vmatpush1.bf16.msra.mxu0 %v451
  %629 = vmatprep.subr.bf16.mxu0 %v456
  %630 = vmatpush1.bf16.msra.mxu0 %v455
  %631 = vmatprep.subr.bf16.mxu0 %v460
  %632 = vmatpush1.bf16.msra.mxu0 %v459
  %633 = vmatprep.subr.bf16.mxu0 %v464
  %634 = vmatpush1.bf16.msra.mxu0 %v463
  %635 = vmatprep.subr.bf16.mxu0 %v468
  %636 = vmatpush1.bf16.msra.mxu0 %v467
  %637 = vmatprep.subr.bf16.mxu0 %v472
  %638 = vmatpush1.bf16.msra.mxu0 %v471
  %639 = vmatprep.subr.bf16.mxu0 %v476
  %640 = vmatpush1.bf16.msra.mxu0 %v475
  %641 = vmatprep.subr.bf16.mxu0 %v480
  %642 = vmatpush1.bf16.msra.mxu0 %v479
  %643 = vmatprep.mubr.bf16.mxu0 %v126
  %644 = vmatmul.mubr.bf16.gmra.mrb[0].mxu0 %v125
  %v645 = vpop.f32.mrb[0].mxu0
  %v646 = vadd.f32 0.0, %v645
  %v647 = vpop.f32.mrb[0].mxu0
  %v648 = vadd.f32 0.0, %v647
  %v649 = vpop.f32.mrb[0].mxu0
  %v650 = vadd.f32 0.0, %v649
  %v651 = vpop.f32.mrb[0].mxu0
  %v652 = vadd.f32 0.0, %v651
  %653 = vdwg.mxu0
  %654 = vmatprep.subr.bf16.mxu0 %v484
  %655 = vmatpush1.bf16.msra.mxu0 %v483
  %656 = vmatprep.subr.bf16.mxu0 %v488
  %657 = vmatpush1.bf16.msra.mxu0 %v487
  %658 = vmatprep.subr.bf16.mxu0 %v492
  %659 = vmatpush1.bf16.msra.mxu0 %v491
  %660 = vmatprep.subr.bf16.mxu0 %v496
  %661 = vmatpush1.bf16.msra.mxu0 %v495
  %662 = vmatprep.subr.bf16.mxu0 %v500
  %663 = vmatpush1.bf16.msra.mxu0 %v499
  %664 = vmatprep.subr.bf16.mxu0 %v504
  %665 = vmatpush1.bf16.msra.mxu0 %v503
  %666 = vmatprep.subr.bf16.mxu0 %v508
  %667 = vmatpush1.bf16.msra.mxu0 %v507
  %668 = vmatprep.subr.bf16.mxu0 %v512
  %669 = vmatpush1.bf16.msra.mxu0 %v511
  %670 = vmatprep.subr.bf16.mxu0 0
  %671 = vmatpush1.bf16.msra.mxu0 0
  %672 = vmatprep.subr.bf16.mxu0 0
  %673 = vmatpush1.bf16.msra.mxu0 0
  %674 = vmatprep.subr.bf16.mxu0 0
  %675 = vmatpush1.bf16.msra.mxu0 0
  %676 = vmatprep.subr.bf16.mxu0 0
  %677 = vmatpush1.bf16.msra.mxu0 0
  %678 = vmatprep.subr.bf16.mxu0 0
  %679 = vmatpush1.bf16.msra.mxu0 0
  %680 = vmatprep.subr.bf16.mxu0 0
  %681 = vmatpush1.bf16.msra.mxu0 0
  %682 = vmatprep.subr.bf16.mxu0 0
  %683 = vmatpush1.bf16.msra.mxu0 0
  %684 = vmatprep.subr.bf16.mxu0 0
  %685 = vmatpush1.bf16.msra.mxu0 0
  %686 = vmatprep.mubr.bf16.mxu0 0
  %687 = vmatmul.mubr.bf16.gmra.mrb[0].mxu0 %v127
  %v688 = vpop.f32.mrb[0].mxu0
  %v689 = vadd.f32 %v646, %v688
  %v690 = vpop.f32.mrb[0].mxu0
  %v691 = vadd.f32 %v648, %v690
  %v692 = vpop.f32.mrb[0].mxu0
  %v693 = vadd.f32 %v650, %v692
  %v694 = vpop.f32.mrb[0].mxu0
  %v695 = vadd.f32 %v652, %v694
  %696 = vdwg.mxu0
  %697 = vmatprep.subr.bf16.mxu0 %v422
  %698 = vmatpush1.bf16.msra.mxu0 %v421
  %699 = vmatprep.subr.bf16.mxu0 %v426
  %700 = vmatpush1.bf16.msra.mxu0 %v425
  %701 = vmatprep.subr.bf16.mxu0 %v430
  %702 = vmatpush1.bf16.msra.mxu0 %v429
  %703 = vmatprep.subr.bf16.mxu0 %v434
  %704 = vmatpush1.bf16.msra.mxu0 %v433
  %705 = vmatprep.subr.bf16.mxu0 %v438
  %706 = vmatpush1.bf16.msra.mxu0 %v437
  %707 = vmatprep.subr.bf16.mxu0 %v442
  %708 = vmatpush1.bf16.msra.mxu0 %v441
  %709 = vmatprep.subr.bf16.mxu0 %v446
  %710 = vmatpush1.bf16.msra.mxu0 %v445
  %711 = vmatprep.subr.bf16.mxu0 %v450
  %712 = vmatpush1.bf16.msra.mxu0 %v449
  %713 = vmatprep.subr.bf16.mxu0 %v454
  %714 = vmatpush1.bf16.msra.mxu0 %v453
  %715 = vmatprep.subr.bf16.mxu0 %v458
  %716 = vmatpush1.bf16.msra.mxu0 %v457
  %717 = vmatprep.subr.bf16.mxu0 %v462
  %718 = vmatpush1.bf16.msra.mxu0 %v461
  %719 = vmatprep.subr.bf16.mxu0 %v466
  %720 = vmatpush1.bf16.msra.mxu0 %v465
  %721 = vmatprep.subr.bf16.mxu0 %v470
  %722 = vmatpush1.bf16.msra.mxu0 %v469
  %723 = vmatprep.subr.bf16.mxu0 %v474
  %724 = vmatpush1.bf16.msra.mxu0 %v473
  %725 = vmatprep.subr.bf16.mxu0 %v478
  %726 = vmatpush1.bf16.msra.mxu0 %v477
  %727 = vmatprep.subr.bf16.mxu0 %v482
  %728 = vmatpush1.bf16.msra.mxu0 %v481
  %729 = vmatprep.mubr.bf16.mxu0 %v126
  %730 = vmatmul.mubr.bf16.gmra.mrb[0].mxu0 %v125
  %v731 = vpop.f32.mrb[0].mxu0
  %v732 = vadd.f32 0.0, %v731
  %v733 = vpop.f32.mrb[0].mxu0
  %v734 = vadd.f32 0.0, %v733
  %v735 = vpop.f32.mrb[0].mxu0
  %v736 = vadd.f32 0.0, %v735
  %v737 = vpop.f32.mrb[0].mxu0
  %v738 = vadd.f32 0.0, %v737
  %739 = vdwg.mxu0
  %740 = vmatprep.subr.bf16.mxu0 %v486
  %741 = vmatpush1.bf16.msra.mxu0 %v485
  %742 = vmatprep.subr.bf16.mxu0 %v490
  %743 = vmatpush1.bf16.msra.mxu0 %v489
  %744 = vmatprep.subr.bf16.mxu0 %v494
  %745 = vmatpush1.bf16.msra.mxu0 %v493
  %746 = vmatprep.subr.bf16.mxu0 %v498
  %747 = vmatpush1.bf16.msra.mxu0 %v497
  %748 = vmatprep.subr.bf16.mxu0 %v502
  %749 = vmatpush1.bf16.msra.mxu0 %v501
  %750 = vmatprep.subr.bf16.mxu0 %v506
  %751 = vmatpush1.bf16.msra.mxu0 %v505
  %752 = vmatprep.subr.bf16.mxu0 %v510
  %753 = vmatpush1.bf16.msra.mxu0 %v509
  %754 = vmatprep.subr.bf16.mxu0 %v514
  %755 = vmatpush1.bf16.msra.mxu0 %v513
  %756 = vmatprep.subr.bf16.mxu0 0
  %757 = vmatpush1.bf16.msra.mxu0 0
  %758 = vmatprep.subr.bf16.mxu0 0
  %759 = vmatpush1.bf16.msra.mxu0 0
  %760 = vmatprep.subr.bf16.mxu0 0
  %761 = vmatpush1.bf16.msra.mxu0 0
  %762 = vmatprep.subr.bf16.mxu0 0
  %763 = vmatpush1.bf16.msra.mxu0 0
  %764 = vmatprep.subr.bf16.mxu0 0
  %765 = vmatpush1.bf16.msra.mxu0 0
  %766 = vmatprep.subr.bf16.mxu0 0
  %767 = vmatpush1.bf16.msra.mxu0 0
  %768 = vmatprep.subr.bf16.mxu0 0
  %769 = vmatpush1.bf16.msra.mxu0 0
  %770 = vmatprep.subr.bf16.mxu0 0
  %771 = vmatpush1.bf16.msra.mxu0 0
  %772 = vmatprep.mubr.bf16.mxu0 0
  %773 = vmatmul.mubr.bf16.gmra.mrb[0].mxu0 %v127
  %v774 = vpop.f32.mrb[0].mxu0
  %v775 = vadd.f32 %v732, %v774
  %v776 = vpop.f32.mrb[0].mxu0
  %v777 = vadd.f32 %v734, %v776
  %v778 = vpop.f32.mrb[0].mxu0
  %v779 = vadd.f32 %v736, %v778
  %v780 = vpop.f32.mrb[0].mxu0
  %v781 = vadd.f32 %v738, %v780
  %782 = vdwg.mxu0
  %s783 = scalar_lea.vmem %s0, 24
  %v784 = vld [vmem:[%s783] sm:$0xff]
  %v785 = vld [vmem:[%s783 + $0x8] sm:$0xf]
  %v786 = vld [vmem:[%s783 + $0xc] sm:$0xff]
  %v787 = vld [vmem:[%s783 + $0x14] sm:$0xf]
  %v792 = vunpack.c.l.b16 %v784
  %v793 = vunpack.c.h.b16 %v784
  %v794 = vunpack.c.l.b16 %v785
  %v795 = vunpack.c.l.b16 %v786
  %v796 = vunpack.c.h.b16 %v786
  %v797 = vunpack.c.l.b16 %v787
  %v798 = vpack.c.b16 %v795, %v792
  %v799 = vpack.c.b16 %v796, %v793
  %v800 = vpack.c.b16 %v797, %v794
  %804 = vmatprep.subr.bf16.mxu0 %v420
  %805 = vmatpush1.bf16.msra.mxu0 %v419
  %806 = vmatprep.subr.bf16.mxu0 %v424
  %807 = vmatpush1.bf16.msra.mxu0 %v423
  %808 = vmatprep.subr.bf16.mxu0 %v428
  %809 = vmatpush1.bf16.msra.mxu0 %v427
  %810 = vmatprep.subr.bf16.mxu0 %v432
  %811 = vmatpush1.bf16.msra.mxu0 %v431
  %812 = vmatprep.subr.bf16.mxu0 %v436
  %813 = vmatpush1.bf16.msra.mxu0 %v435
  %814 = vmatprep.subr.bf16.mxu0 %v440
  %815 = vmatpush1.bf16.msra.mxu0 %v439
  %816 = vmatprep.subr.bf16.mxu0 %v444
  %817 = vmatpush1.bf16.msra.mxu0 %v443
  %818 = vmatprep.subr.bf16.mxu0 %v448
  %819 = vmatpush1.bf16.msra.mxu0 %v447
  %820 = vmatprep.subr.bf16.mxu0 %v452
  %821 = vmatpush1.bf16.msra.mxu0 %v451
  %822 = vmatprep.subr.bf16.mxu0 %v456
  %823 = vmatpush1.bf16.msra.mxu0 %v455
  %824 = vmatprep.subr.bf16.mxu0 %v460
  %825 = vmatpush1.bf16.msra.mxu0 %v459
  %826 = vmatprep.subr.bf16.mxu0 %v464
  %827 = vmatpush1.bf16.msra.mxu0 %v463
  %828 = vmatprep.subr.bf16.mxu0 %v468
  %829 = vmatpush1.bf16.msra.mxu0 %v467
  %830 = vmatprep.subr.bf16.mxu0 %v472
  %831 = vmatpush1.bf16.msra.mxu0 %v471
  %832 = vmatprep.subr.bf16.mxu0 %v476
  %833 = vmatpush1.bf16.msra.mxu0 %v475
  %834 = vmatprep.subr.bf16.mxu0 %v480
  %835 = vmatpush1.bf16.msra.mxu0 %v479
  %836 = vmatprep.mubr.bf16.mxu0 %v799
  %837 = vmatmul.mubr.bf16.gmra.mrb[0].mxu0 %v798
  %v838 = vpop.f32.mrb[0].mxu0
  %v839 = vadd.f32 0.0, %v838
  %v840 = vpop.f32.mrb[0].mxu0
  %v841 = vadd.f32 0.0, %v840
  %v842 = vpop.f32.mrb[0].mxu0
  %v843 = vadd.f32 0.0, %v842
  %v844 = vpop.f32.mrb[0].mxu0
  %v845 = vadd.f32 0.0, %v844
  %846 = vdwg.mxu0
  %847 = vmatprep.subr.bf16.mxu0 %v484
  %848 = vmatpush1.bf16.msra.mxu0 %v483
  %849 = vmatprep.subr.bf16.mxu0 %v488
  %850 = vmatpush1.bf16.msra.mxu0 %v487
  %851 = vmatprep.subr.bf16.mxu0 %v492
  %852 = vmatpush1.bf16.msra.mxu0 %v491
  %853 = vmatprep.subr.bf16.mxu0 %v496
  %854 = vmatpush1.bf16.msra.mxu0 %v495
  %855 = vmatprep.subr.bf16.mxu0 %v500
  %856 = vmatpush1.bf16.msra.mxu0 %v499
  %857 = vmatprep.subr.bf16.mxu0 %v504
  %858 = vmatpush1.bf16.msra.mxu0 %v503
  %859 = vmatprep.subr.bf16.mxu0 %v508
  %860 = vmatpush1.bf16.msra.mxu0 %v507
  %861 = vmatprep.subr.bf16.mxu0 %v512
  %862 = vmatpush1.bf16.msra.mxu0 %v511
  %863 = vmatprep.subr.bf16.mxu0 0
  %864 = vmatpush1.bf16.msra.mxu0 0
  %865 = vmatprep.subr.bf16.mxu0 0
  %866 = vmatpush1.bf16.msra.mxu0 0
  %867 = vmatprep.subr.bf16.mxu0 0
  %868 = vmatpush1.bf16.msra.mxu0 0
  %869 = vmatprep.subr.bf16.mxu0 0
  %870 = vmatpush1.bf16.msra.mxu0 0
  %871 = vmatprep.subr.bf16.mxu0 0
  %872 = vmatpush1.bf16.msra.mxu0 0
  %873 = vmatprep.subr.bf16.mxu0 0
  %874 = vmatpush1.bf16.msra.mxu0 0
  %875 = vmatprep.subr.bf16.mxu0 0
  %876 = vmatpush1.bf16.msra.mxu0 0
  %877 = vmatprep.subr.bf16.mxu0 0
  %878 = vmatpush1.bf16.msra.mxu0 0
  %879 = vmatprep.mubr.bf16.mxu0 0
  %880 = vmatmul.mubr.bf16.gmra.mrb[0].mxu0 %v800
  %v881 = vpop.f32.mrb[0].mxu0
  %v882 = vadd.f32 %v839, %v881
  %v883 = vpop.f32.mrb[0].mxu0
  %v884 = vadd.f32 %v841, %v883
  %v885 = vpop.f32.mrb[0].mxu0
  %v886 = vadd.f32 %v843, %v885
  %v887 = vpop.f32.mrb[0].mxu0
  %v888 = vadd.f32 %v845, %v887
  %889 = vdwg.mxu0
  %890 = vmatprep.subr.bf16.mxu0 %v422
  %891 = vmatpush1.bf16.msra.mxu0 %v421
  %892 = vmatprep.subr.bf16.mxu0 %v426
  %893 = vmatpush1.bf16.msra.mxu0 %v425
  %894 = vmatprep.subr.bf16.mxu0 %v430
  %895 = vmatpush1.bf16.msra.mxu0 %v429
  %896 = vmatprep.subr.bf16.mxu0 %v434
  %897 = vmatpush1.bf16.msra.mxu0 %v433
  %898 = vmatprep.subr.bf16.mxu0 %v438
  %899 = vmatpush1.bf16.msra.mxu0 %v437
  %900 = vmatprep.subr.bf16.mxu0 %v442
  %901 = vmatpush1.bf16.msra.mxu0 %v441
  %902 = vmatprep.subr.bf16.mxu0 %v446
  %903 = vmatpush1.bf16.msra.mxu0 %v445
  %904 = vmatprep.subr.bf16.mxu0 %v450
  %905 = vmatpush1.bf16.msra.mxu0 %v449
  %906 = vmatprep.subr.bf16.mxu0 %v454
  %907 = vmatpush1.bf16.msra.mxu0 %v453
  %908 = vmatprep.subr.bf16.mxu0 %v458
  %909 = vmatpush1.bf16.msra.mxu0 %v457
  %910 = vmatprep.subr.bf16.mxu0 %v462
  %911 = vmatpush1.bf16.msra.mxu0 %v461
  %912 = vmatprep.subr.bf16.mxu0 %v466
  %913 = vmatpush1.bf16.msra.mxu0 %v465
  %914 = vmatprep.subr.bf16.mxu0 %v470
  %915 = vmatpush1.bf16.msra.mxu0 %v469
  %916 = vmatprep.subr.bf16.mxu0 %v474
  %917 = vmatpush1.bf16.msra.mxu0 %v473
  %918 = vmatprep.subr.bf16.mxu0 %v478
  %919 = vmatpush1.bf16.msra.mxu0 %v477
  %920 = vmatprep.subr.bf16.mxu0 %v482
  %921 = vmatpush1.bf16.msra.mxu0 %v481
  %922 = vmatprep.mubr.bf16.mxu0 %v799
  %923 = vmatmul.mubr.bf16.gmra.mrb[0].mxu0 %v798
  %v924 = vpop.f32.mrb[0].mxu0
  %v925 = vadd.f32 0.0, %v924
  %v926 = vpop.f32.mrb[0].mxu0
  %v927 = vadd.f32 0.0, %v926
  %v928 = vpop.f32.mrb[0].mxu0
  %v929 = vadd.f32 0.0, %v928
  %v930 = vpop.f32.mrb[0].mxu0
  %v931 = vadd.f32 0.0, %v930
  %932 = vdwg.mxu0
  %933 = vmatprep.subr.bf16.mxu0 %v486
  %934 = vmatpush1.bf16.msra.mxu0 %v485
  %935 = vmatprep.subr.bf16.mxu0 %v490
  %936 = vmatpush1.bf16.msra.mxu0 %v489
  %937 = vmatprep.subr.bf16.mxu0 %v494
  %938 = vmatpush1.bf16.msra.mxu0 %v493
  %939 = vmatprep.subr.bf16.mxu0 %v498
  %940 = vmatpush1.bf16.msra.mxu0 %v497
  %941 = vmatprep.subr.bf16.mxu0 %v502
  %942 = vmatpush1.bf16.msra.mxu0 %v501
  %943 = vmatprep.subr.bf16.mxu0 %v506
  %944 = vmatpush1.bf16.msra.mxu0 %v505
  %945 = vmatprep.subr.bf16.mxu0 %v510
  %946 = vmatpush1.bf16.msra.mxu0 %v509
  %947 = vmatprep.subr.bf16.mxu0 %v514
  %948 = vmatpush1.bf16.msra.mxu0 %v513
  %949 = vmatprep.subr.bf16.mxu0 0
  %950 = vmatpush1.bf16.msra.mxu0 0
  %951 = vmatprep.subr.bf16.mxu0 0
  %952 = vmatpush1.bf16.msra.mxu0 0
  %953 = vmatprep.subr.bf16.mxu0 0
  %954 = vmatpush1.bf16.msra.mxu0 0
  %955 = vmatprep.subr.bf16.mxu0 0
  %956 = vmatpush1.bf16.msra.mxu0 0
  %957 = vmatprep.subr.bf16.mxu0 0
  %958 = vmatpush1.bf16.msra.mxu0 0
  %959 = vmatprep.subr.bf16.mxu0 0
  %960 = vmatpush1.bf16.msra.mxu0 0
  %961 = vmatprep.subr.bf16.mxu0 0
  %962 = vmatpush1.bf16.msra.mxu0 0
  %963 = vmatprep.subr.bf16.mxu0 0
  %964 = vmatpush1.bf16.msra.mxu0 0
  %965 = vmatprep.mubr.bf16.mxu0 0
  %966 = vmatmul.mubr.bf16.gmra.mrb[0].mxu0 %v800
  %v967 = vpop.f32.mrb[0].mxu0
  %v968 = vadd.f32 %v925, %v967
  %v969 = vpop.f32.mrb[0].mxu0
  %v970 = vadd.f32 %v927, %v969
  %v971 = vpop.f32.mrb[0].mxu0
  %v972 = vadd.f32 %v929, %v971
  %v973 = vpop.f32.mrb[0].mxu0
  %v974 = vadd.f32 %v931, %v973
  %975 = vdwg.mxu0
  %v976 = vmax.f32 %v689, %v882
  %v977 = vmax.f32 %v691, %v884
  %v978 = vmax.f32 %v775, %v968
  %v979 = vmax.f32 %v777, %v970
  %v980 = vmax.f32 %v693, %v886
  %v981 = vmax.f32 %v695, %v888
  %v982 = vmax.f32 %v779, %v972
  %v983 = vmax.f32 %v781, %v974
  %v984 = vmax.f32 %v976, %v978
  %v985 = vmax.f32 %v977, %v979
  %v986 = vmax.f32 %v980, %v982
  %v987 = vmax.f32 %v981, %v983
  %v988 = vld [vmem:[%s2] sm:$0x3]
  %v990 = vlaneseq
  %v991 = vshrl.u32 %v990, 7
  %v992 = vsub.s32 0, %v991
  %v993 = vrot.slane %v988, %v992
  %v994 = vlaneseq
  %v995 = vshrl.u32 %v994, 7
  %v996 = vsub.s32 1, %v995
  %v997 = vrot.slane %v988, %v996
  %v1000 = vadd.f32 %v984, %v993
  %v1001 = vadd.f32 %v985, %v997
  %v1002 = vadd.f32 %v986, %v993
  %v1003 = vadd.f32 %v987, %v997
  %1004 = vst [vmem:[%s3] sm:$0xff] %v1000
  %1005 = vst [vmem:[%s3 + $0x8] sm:$0xff] %v1001
  %1006 = vst [vmem:[%s3 + $0x10] sm:$0xff] %v1002
  %1007 = vst [vmem:[%s3 + $0x18] sm:$0xff] %v1003
  // Predicated region
  $region14: #{nn5_forward.1} parent=0 // pred_check
    _
  $region15: #{nn5_forward.1} parent=0 // pred_check_branch
    %1009 = sbr.rel (0) target = $region17
  $region16: #{nn5_forward.1} parent=0 // pred_region
    _
  $region17: #{nn5_forward.1} parent=0 // pred_fallthru
    _
  // Predicated region
  $region18: #{nn5_forward.1} parent=0 // pred_check
    _
  $region19: #{nn5_forward.1} parent=0 // pred_check_branch
    %1011 = sbr.rel (0) target = $region21
  $region20: #{nn5_forward.1} parent=0 // pred_region
    _
  $region21: #{nn5_forward.1} parent=0 // pred_fallthru
    _

</llo_original>
